<compile_context>
chip_gen: v5e
topology: v5e:2x2
jax: 0.10.0
libtpu: 0.0.40
codegen_flags: <defaults>
</compile_context>

<pallas_src>
import math
from functools import partial

import jax
import jax.numpy as jnp
from jax.experimental import pallas as pl
from jax.experimental.pallas import tpu as pltpu


# ----------------------------- init-time helpers -----------------------------

def make_positional_encoding(d_model: int, max_len: int = 5000,
                             dtype=jnp.float32) -> jnp.ndarray:
    """Sinusoidal pe table (mirrors the torch __init__), built once at init.

    Returns a dense 2-D [max_len, d_model] table already cast to the model dtype,
    so the per-call forward does no slice/convert and no size-1 batch dim exists.
    """
    assert d_model % 2 == 0, "sinusoidal positional encoding requires an even d_model"
    position = jnp.arange(max_len, dtype=jnp.float32)[:, None]                 # [L, 1]
    div_term = jnp.exp(jnp.arange(0, d_model, 2, dtype=jnp.float32)
                       * (-math.log(10000.0) / d_model))                       # [D/2]
    angles = position * div_term                                               # [L, D/2]
    pe = jnp.zeros((max_len, d_model), jnp.float32)
    pe = pe.at[:, 0::2].set(jnp.sin(angles))
    pe = pe.at[:, 1::2].set(jnp.cos(angles))
    return pe.astype(dtype)


# ----------------------------- tiling / VMEM plumbing ------------------------

_HEADROOM_BYTES = 4 << 20      # compiler-internal scratch etc.
_PIPELINE_BUFFERS = 2          # BlockSpec double-buffering


def _round_up(n: int, m: int) -> int:
    return ((n + m - 1) // m) * m


def _sublane(itemsize: int) -> int:
    # dtype sublane packing: f32 -> 8 rows, bf16 -> 16, int8/fp8 -> 32.
    return max(8, 32 // max(1, itemsize))


def _vmem_limit_bytes() -> int:
    """Generation-aware scoped-VMEM limit.

    v5e/v6e have 128 MiB physical VMEM per core -> allow 64 MiB scoped;
    v7x has 64 MiB per TensorCore -> cap at 48 MiB.
    """
    try:
        phys = pltpu.get_tpu_info().vmem_capacity_bytes
    except Exception:
        phys = 64 << 20                       # conservative: v7x per-TC size
    if phys >= (128 << 20):
        return 64 << 20
    return min(48 << 20, max(16 << 20, (phys * 3) // 4))


def _pick_seq_tile(seq_len: int, bytes_per_seq_row: int, sub: int, budget: int) -> int:
    rows = budget // (_PIPELINE_BUFFERS * max(1, bytes_per_seq_row))
    rows = (rows // sub) * sub                # sublane-aligned for this dtype
    s_pad = _round_up(seq_len, sub)
    if s_pad > sub:
        # Keep >= 2 seq blocks whenever possible: both v7x TensorCores get grid
        # work ('parallel' axis) and the pipeline has iterations to overlap.
        rows = min(rows, _round_up(pl.cdiv(seq_len, 2), sub))
    return max(sub, min(rows, s_pad))


# ----------------------------- kernels ---------------------------------------

def _add_bcast_kernel(x_ref, pe_ref, o_ref):
    # x/o: (seq_tile, b_tile, D); pe: (seq_tile, D) broadcast over the batch
    # sublanes.  Pure VPU work, fully hidden under the HBM roofline.
    o_ref[...] = x_ref[...] + pe_ref[...][:, None, :]


def _add_lane_tile_kernel(x_ref, pe_ref, o_ref, *, batch):
    # x/o: (seq_tile, B*D) lane-dense view; pe: (seq_tile, D) replicated across
    # the batch lanes in-register (free under the HBM roofline).  Only the
    # narrow pe block is streamed from HBM -> ~2N bytes instead of 3N.
    o_ref[...] = x_ref[...] + jnp.tile(pe_ref[...], (1, batch))


def _add_kernel(x_ref, pe_ref, o_ref):
    # Dense elementwise add of two identically shaped 2-D tiles (fallback path).
    o_ref[...] = x_ref[...] + pe_ref[...]


# ----------------------------- forward ---------------------------------------

def positional_encoding_forward(x: jnp.ndarray, pe: jnp.ndarray,
                                tile_budget_bytes: int | None = None) -> jnp.ndarray:
    """out = x + pe[:seq_len]  (broadcast over batch).

    x:  [seq_len, batch, d_model]
    pe: [max_len, d_model] table from make_positional_encoding, already in x's dtype.
    """
    S, B, D = x.shape
    L, Dp = pe.shape
    if Dp != D or L < S:
        raise ValueError("pe table has wrong d_model or is shorter than seq_len")
    if pe.dtype != x.dtype:
        raise ValueError(
            "pe dtype must match x dtype; build the table once at init with "
            "make_positional_encoding(d_model, max_len, dtype=x.dtype) instead of "
            "paying a full-table convert on every forward call")

    itemsize = jnp.dtype(x.dtype).itemsize
    sub = _sublane(itemsize)
    vmem_limit = _vmem_limit_bytes()
    budget = (tile_budget_bytes if tile_budget_bytes is not None
              else max(1 << 20, vmem_limit - _HEADROOM_BYTES))

    if D % 128 == 0:
        # ---------------- lane-aligned path: fold batch into the block. ------
        b_tile = B
        if _PIPELINE_BUFFERS * sub * itemsize * (2 * B * D + D) > budget:
            # (rare) batch*d_model too wide for a full-batch block even at the
            # minimum seq tile: tile the batch axis too, sublane-aligned so the
            # block's second-to-last dim stays legal.
            fit = budget // (_PIPELINE_BUFFERS * sub * itemsize * 2 * D)
            b_tile = max(min(sub, B), min(B, (fit // sub) * sub))
        bytes_per_seq_row = itemsize * (2 * b_tile * D + D)     # x + out + pe
        seq_tile = _pick_seq_tile(S, bytes_per_seq_row, sub, budget)
        grid = (pl.cdiv(S, seq_tile), pl.cdiv(B, b_tile))       # batch_tiles==1 normally
        return pl.pallas_call(
            _add_bcast_kernel,
            out_shape=jax.ShapeDtypeStruct((S, B, D), x.dtype),
            grid_spec=pltpu.PrefetchScalarGridSpec(
                num_scalar_prefetch=0,
                grid=grid,
                in_specs=[
                    # Contiguous seq-slice DMA of x (batch folded into the block).
                    pl.BlockSpec((seq_tile, b_tile, D), lambda i, b: (i, b, 0)),
                    # Narrow pe block; index ignores the batch axis so each pe
                    # tile is fetched once per seq tile and reused.
                    pl.BlockSpec((seq_tile, D), lambda i, b: (i, 0)),
                ],
                out_specs=pl.BlockSpec((seq_tile, b_tile, D), lambda i, b: (i, b, 0)),
            ),
            compiler_params=pltpu.CompilerParams(
                dimension_semantics=("parallel", "parallel"),
                vmem_limit_bytes=vmem_limit,
            ),
        )(x, pe)

    # ---------------- d_model not a multiple of 128: lane-pack batch. --------
    # x is viewed (free, row-major) as [S, B*D] so the output stores stay
    # lane-dense; only the narrow pe block is streamed and widened in-kernel.
    W = B * D
    x2 = x.reshape(S, W)
    bytes_per_seq_row = itemsize * (2 * W + D)                   # x + out + narrow pe
    seq_tile = _pick_seq_tile(S, bytes_per_seq_row, sub, budget)
    grid = (pl.cdiv(S, seq_tile),)
    cparams = pltpu.CompilerParams(
        dimension_semantics=("parallel",),
        vmem_limit_bytes=vmem_limit,
    )
    try:
        out2 = pl.pallas_call(
            partial(_add_lane_tile_kernel, batch=B),
            out_shape=jax.ShapeDtypeStruct((S, W), x.dtype),
            grid_spec=pltpu.PrefetchScalarGridSpec(
                num_scalar_prefetch=0,
                grid=grid,
                in_specs=[
                    pl.BlockSpec((seq_tile, W), lambda i: (i, 0)),
                    pl.BlockSpec((seq_tile, D), lambda i: (i, 0)),   # narrow pe
                ],
                out_specs=pl.BlockSpec((seq_tile, W), lambda i: (i, 0)),
            ),
            compiler_params=cparams,
        )(x2, pe)
    except Exception:
        # TODO(synk): in-kernel lane replication of pe did not lower on this
        # toolchain; fall back to streaming a lane-tiled pe slab (correct but
        # 3N instead of 2N HBM bytes).
        pe_wide = jnp.tile(pe[:S], (1, B))
        out2 = pl.pallas_call(
            _add_kernel,
            out_shape=jax.ShapeDtypeStruct((S, W), x.dtype),
            grid_spec=pltpu.PrefetchScalarGridSpec(
                num_scalar_prefetch=0,
                grid=grid,
                in_specs=[
                    pl.BlockSpec((seq_tile, W), lambda i: (i, 0)),
                    pl.BlockSpec((seq_tile, W), lambda i: (i, 0)),
                ],
                out_specs=pl.BlockSpec((seq_tile, W), lambda i: (i, 0)),
            ),
            compiler_params=cparams,
        )(x2, pe_wide)
    return out2.reshape(S, B, D)


# ----------------------------- demo / self-test -------------------------------

if __name__ == "__main__":
    key = jax.random.PRNGKey(0)
    k1, k2, k3 = jax.random.split(key, 3)
    max_len = 64

    # Demo 1: small d_model -> lane-pack path (narrow pe widened in-kernel).
    S1, B1, D1 = 8, 4, 32
    x1 = jax.random.normal(k1, (S1, B1, D1), dtype=jnp.float32)
    pe1 = make_positional_encoding(D1, max_len, dtype=x1.dtype)          # [64, 32]
    out1 = jax.block_until_ready(positional_encoding_forward(x1, pe1))
    ref1 = x1 + pe1[:S1][:, None, :]
    assert out1.shape == x1.shape and out1.dtype == x1.dtype
    assert jnp.allclose(out1, ref1, atol=1e-6), "lane-pack path mismatch vs reference"

    # Demo 2: d_model % 128 == 0 -> batch folded into the block (contiguous DMAs).
    S2, B2, D2 = 16, 2, 128
    x2 = jax.random.normal(k2, (S2, B2, D2), dtype=jnp.float32)
    pe2 = make_positional_encoding(D2, max_len, dtype=x2.dtype)          # [64, 128]
    out2 = jax.block_until_ready(positional_encoding_forward(x2, pe2))
    ref2 = x2 + pe2[:S2][:, None, :]
    assert out2.shape == x2.shape and out2.dtype == x2.dtype
    assert jnp.allclose(out2, ref2, atol=1e-6), "aligned path mismatch vs reference"

    # Demo 3: bf16 on the aligned path -> exercises 16-row sublane alignment.
    S3, B3, D3 = 32, 2, 128
    x3 = jax.random.normal(k3, (S3, B3, D3), dtype=jnp.float32).astype(jnp.bfloat16)
    pe3 = make_positional_encoding(D3, max_len, dtype=x3.dtype)
    out3 = jax.block_until_ready(positional_encoding_forward(x3, pe3))
    ref3 = x3 + pe3[:S3][:, None, :]
    assert out3.shape == x3.shape and out3.dtype == x3.dtype
    assert jnp.allclose(out3.astype(jnp.float32), ref3.astype(jnp.float32),
                        atol=1e-2), "bf16 aligned path mismatch vs reference"

    print("KERNEL_OK")
</pallas_src>

<mosaic_0001>
module attributes {stable_mosaic.version = 11 : i64} {
  func.func @_add_lane_tile_kernel(%arg0: i32, %arg1: memref<8x128xf32, #tpu.memory_space<vmem>>, %arg2: memref<8x32xf32, #tpu.memory_space<vmem>>, %arg3: memref<8x128xf32, #tpu.memory_space<vmem>>) attributes {dimension_semantics = [#tpu.dimension_semantics<parallel>], iteration_bounds = array<i64: 1>, scalar_prefetch = 0 : i64, scratch_operands = 0 : i64, tpu.core_type = #tpu.core_type<tc>, window_params = [{transform_indices = @transform_0, window_bounds = array<i64: 8, 128>}, {transform_indices = @transform_1, window_bounds = array<i64: 8, 32>}, {transform_indices = @transform_2, window_bounds = array<i64: 8, 128>}]} {
    %c0 = arith.constant 0 : index
    %c0_0 = arith.constant 0 : index
    %0 = vector.load %arg1[%c0, %c0_0] : memref<8x128xf32, #tpu.memory_space<vmem>>, vector<8x128xf32>
    %c0_1 = arith.constant 0 : index
    %c0_2 = arith.constant 0 : index
    %1 = vector.load %arg2[%c0_1, %c0_2] : memref<8x32xf32, #tpu.memory_space<vmem>>, vector<8x32xf32>
    %2 = tpu.concatenate %1, %1, %1, %1 in 1 : vector<8x32xf32>, vector<8x32xf32>, vector<8x32xf32>, vector<8x32xf32> -> vector<8x128xf32>
    %3 = arith.addf %0, %2 : vector<8x128xf32>
    %c0_3 = arith.constant 0 : index
    %c0_4 = arith.constant 0 : index
    %4 = vector.load %arg3[%c0_3, %c0_4] : memref<8x128xf32, #tpu.memory_space<vmem>>, vector<8x128xf32>
    tpu.vector_store %arg3[%c0_3, %c0_4], %3 {strides = array<i32>} : memref<8x128xf32, #tpu.memory_space<vmem>>, vector<8x128xf32>,
    return
  }
  func.func @transform_0(%arg0: i32) -> (i32, i32) {
    %c0_i32 = arith.constant 0 : i32
    %c0_i32_0 = arith.constant 0 : i32
    return %arg0, %c0_i32 : i32, i32
  }
  func.func @transform_1(%arg0: i32) -> (i32, i32) {
    %c0_i32 = arith.constant 0 : i32
    %c0_i32_0 = arith.constant 0 : i32
    return %arg0, %c0_i32 : i32, i32
  }
  func.func @transform_2(%arg0: i32) -> (i32, i32) {
    %c0_i32 = arith.constant 0 : i32
    %c0_i32_0 = arith.constant 0 : i32
    return %arg0, %c0_i32 : i32, i32
  }
}

module attributes {stable_mosaic.version = 11 : i64} {
  func.func @_add_kernel(%arg0: i32, %arg1: memref<8x128xf32, #tpu.memory_space<vmem>>, %arg2: memref<8x128xf32, #tpu.memory_space<vmem>>, %arg3: memref<8x128xf32, #tpu.memory_space<vmem>>) attributes {dimension_semantics = [#tpu.dimension_semantics<parallel>], iteration_bounds = array<i64: 1>, scalar_prefetch = 0 : i64, scratch_operands = 0 : i64, tpu.core_type = #tpu.core_type<tc>, window_params = [{transform_indices = @transform_0, window_bounds = array<i64: 8, 128>}, {transform_indices = @transform_1, window_bounds = array<i64: 8, 128>}, {transform_indices = @transform_2, window_bounds = array<i64: 8, 128>}]} {
    %c0 = arith.constant 0 : index
    %c0_0 = arith.constant 0 : index
    %0 = vector.load %arg1[%c0, %c0_0] : memref<8x128xf32, #tpu.memory_space<vmem>>, vector<8x128xf32>
    %c0_1 = arith.constant 0 : index
    %c0_2 = arith.constant 0 : index
    %1 = vector.load %arg2[%c0_1, %c0_2] : memref<8x128xf32, #tpu.memory_space<vmem>>, vector<8x128xf32>
    %2 = arith.addf %0, %1 : vector<8x128xf32>
    %c0_3 = arith.constant 0 : index
    %c0_4 = arith.constant 0 : index
    %3 = vector.load %arg3[%c0_3, %c0_4] : memref<8x128xf32, #tpu.memory_space<vmem>>, vector<8x128xf32>
    tpu.vector_store %arg3[%c0_3, %c0_4], %2 {strides = array<i32>} : memref<8x128xf32, #tpu.memory_space<vmem>>, vector<8x128xf32>,
    return
  }
  func.func @transform_0(%arg0: i32) -> (i32, i32) {
    %c0_i32 = arith.constant 0 : i32
    %c0_i32_0 = arith.constant 0 : i32
    return %arg0, %c0_i32 : i32, i32
  }
  func.func @transform_1(%arg0: i32) -> (i32, i32) {
    %c0_i32 = arith.constant 0 : i32
    %c0_i32_0 = arith.constant 0 : i32
    return %arg0, %c0_i32 : i32, i32
  }
  func.func @transform_2(%arg0: i32) -> (i32, i32) {
    %c0_i32 = arith.constant 0 : i32
    %c0_i32_0 = arith.constant 0 : i32
    return %arg0, %c0_i32 : i32, i32
  }
}

</mosaic_0001>

<llo_original>
// kernel: tpu_custom_call.1
$region0: #{tpu_custom_call.1}
  #allocation0 [shape = 'u32[]', space=smem, size = 0x4, offset = 0x4, fixed_abs, tag = 'smem constant byte address 0x4 - core index']
  #allocation1 [shape = 'u32[72,128]{1,0:T(1,128)}', space=vmem, size = 0x9000, scoped, tag = 'internal scratch']
  %s0 = inlined_call_operand.vmem [shape: f32[8,128], index: 0, kind: input, shape index: {}]
  %s1 = inlined_call_operand.vmem [shape: f32[64,32], index: 1, kind: input, shape index: {}]
  %s2 = inlined_call_operand.hbm [shape: f32[8,128], index: 2, kind: output, shape index: {}]
  %s3 = sld [smem:[#allocation0]]
  $region18: #{tpu_custom_call.1} parent=0
    _
  %s5 = ssub.s32 1, %s3
  %s6 = scalar_select 0, %s5, %s3
  $region1: #{tpu_custom_call.1} parent=0
    #allocation2 [shape = 'u8[4096]{0}', space=vmem, size = 0x1000, scoped, tag = 'output window, operand 0, single buffered']
    #allocation3 [shape = 's32[1]{0}', space=sflag, size = 0x4, scoped, tag = 'scoped memory for tpu_custom_call.1']
    %7 = vsyncpa [#allocation3], 0
    // Predicated region
    $region2: #{tpu_custom_call.1} parent=1 // pred_check
      _
    $region3: #{tpu_custom_call.1} parent=1 // pred_check_branch
      %9 = sbr.rel (0) target = $region5
    $region4: #{tpu_custom_call.1} parent=1 // pred_region
      _
    $region5: #{tpu_custom_call.1} parent=1 // pred_fallthru
      _
    // Predicated region
    $region6: #{tpu_custom_call.1} parent=1 // pred_check
      _
    $region7: #{tpu_custom_call.1} parent=1 // pred_check_branch
      %11 = sbr.rel (0) target = $region9
    $region8: #{tpu_custom_call.1} parent=1 // pred_region
      _
    $region9: #{tpu_custom_call.1} parent=1 // pred_fallthru
      _
    %v12 = vld [vmem:[%s0] sm:$0xff]
    %v13 = vld [vmem:[%s1] sm:$0xff]
    %15 = vrot.lane.b32.xlu0 %v13, 32
    %v16 = vpop.permute.xlu0 %15
    %18 = vrot.lane.b32.xlu0 %v13, 64
    %v19 = vpop.permute.xlu0 %18
    %21 = vrot.lane.b32.xlu0 %v13, 96
    %v22 = vpop.permute.xlu0 %21
    %vm24 = vcmask 261120
    %v25 = vsel %vm24, %v13, %v16
    %vm26 = vcmask 523264
    %v27 = vsel %vm26, %v25, %v19
    %vm28 = vcmask 785408
    %v29 = vsel %vm28, %v27, %v22
    %v30 = vadd.f32 %v12, %v29
    %31 = vst [vmem:[#allocation2] sm:$0xff] %v30
    // Predicated region
    $region10: #{tpu_custom_call.1} parent=1 // pred_check
      _
    $region11: #{tpu_custom_call.1} parent=1 // pred_check_branch
      %33 = sbr.rel (0) target = $region13
    $region12: #{tpu_custom_call.1} parent=1 // pred_region
      %35 = vsyncadd [#allocation3], 0
      %s37 = sshll.u32 [#allocation2], 4
      %s38 = int_to_ptr.vmem [resolvable:$true] %s37
      %s39 = sshll.u32 %s2, 4
      %s40 = int_to_ptr.hbm [resolvable:$true] %s39
      %42 = dma.vmem_to_hbm [thread:$0]  %s38, 128, %s40, [#allocation3]
    $region13: #{tpu_custom_call.1} parent=1 // pred_fallthru
      _
    // Predicated region
    $region14: #{tpu_custom_call.1} parent=1 // pred_check
      _
    $region15: #{tpu_custom_call.1} parent=1 // pred_check_branch
      %44 = sbr.rel (0) target = $region17
    $region16: #{tpu_custom_call.1} parent=1 // pred_region
      %46 = dma.done [#allocation3], 128
    $region17: #{tpu_custom_call.1} parent=1 // pred_fallthru
      _
    %47 = vsyncpa [#allocation3], 1

// kernel: tpu_custom_call.1
$region0: #{tpu_custom_call.1}
  #allocation0 [shape = 'u32[]', space=smem, size = 0x4, offset = 0x4, fixed_abs, tag = 'smem constant byte address 0x4 - core index']
  #allocation1 [shape = 'u32[72,128]{1,0:T(1,128)}', space=vmem, size = 0x9000, scoped, tag = 'internal scratch']
  %s0 = inlined_call_operand.hbm [shape: f32[8,128], index: 0, kind: input, shape index: {}]
  %s1 = inlined_call_operand.hbm [shape: f32[8,128], index: 1, kind: input, shape index: {}]
  %s2 = inlined_call_operand.hbm [shape: f32[8,128], index: 2, kind: output, shape index: {}]
  %s3 = sld [smem:[#allocation0]]
  $region26: #{tpu_custom_call.1} parent=0
    _
  %s5 = ssub.s32 1, %s3
  %s6 = scalar_select 0, %s5, %s3
  $region1: #{tpu_custom_call.1} parent=0
    #allocation2 [shape = 'u8[4096]{0}', space=vmem, size = 0x1000, scoped, tag = 'input window, operand 0, single buffered']
    #allocation3 [shape = 's32[1]{0}', space=sflag, size = 0x4, scoped, tag = 'scoped memory for tpu_custom_call.1']
    #allocation4 [shape = 's32[1]{0}', space=sflag, size = 0x4, scoped, tag = 'scoped memory for tpu_custom_call.1']
    #allocation5 [shape = 'u8[4096]{0}', space=vmem, size = 0x1000, scoped, tag = 'input window, operand 1, single buffered']
    #allocation6 [shape = 's32[1]{0}', space=sflag, size = 0x4, scoped, tag = 'scoped memory for tpu_custom_call.1']
    #allocation7 [shape = 'u8[4096]{0}', space=vmem, size = 0x1000, scoped, tag = 'output window, operand 0, single buffered']
    %7 = vsyncpa [#allocation3], 0
    %8 = vsyncpa [#allocation6], 0
    %9 = vsyncpa [#allocation4], 0
    // Predicated region
    $region2: #{tpu_custom_call.1} parent=1 // pred_check
      _
    $region3: #{tpu_custom_call.1} parent=1 // pred_check_branch
      %11 = sbr.rel (0) target = $region5
    $region4: #{tpu_custom_call.1} parent=1 // pred_region
      %13 = vsyncadd [#allocation3], 0
      %s15 = sshll.u32 %s0, 4
      %s16 = int_to_ptr.hbm [resolvable:$true] %s15
      %s17 = sshll.u32 [#allocation2], 4
      %s18 = int_to_ptr.vmem [resolvable:$true] %s17
      %20 = dma.hbm_to_vmem [thread:$0]  %s16, 128, %s18, [#allocation3]
    $region5: #{tpu_custom_call.1} parent=1 // pred_fallthru
      _
    // Predicated region
    $region6: #{tpu_custom_call.1} parent=1 // pred_check
      _
    $region7: #{tpu_custom_call.1} parent=1 // pred_check_branch
      %22 = sbr.rel (0) target = $region9
    $region8: #{tpu_custom_call.1} parent=1 // pred_region
      %24 = vsyncadd [#allocation6], 0
      %s26 = sshll.u32 %s1, 4
      %s27 = int_to_ptr.hbm [resolvable:$true] %s26
      %s28 = sshll.u32 [#allocation5], 4
      %s29 = int_to_ptr.vmem [resolvable:$true] %s28
      %31 = dma.hbm_to_vmem [thread:$0]  %s27, 128, %s29, [#allocation6]
    $region9: #{tpu_custom_call.1} parent=1 // pred_fallthru
      _
    // Predicated region
    $region10: #{tpu_custom_call.1} parent=1 // pred_check
      _
    $region11: #{tpu_custom_call.1} parent=1 // pred_check_branch
      %33 = sbr.rel (0) target = $region13
    $region12: #{tpu_custom_call.1} parent=1 // pred_region
      %35 = dma.done [#allocation3], 128
    $region13: #{tpu_custom_call.1} parent=1 // pred_fallthru
      _
    // Predicated region
    $region14: #{tpu_custom_call.1} parent=1 // pred_check
      _
    $region15: #{tpu_custom_call.1} parent=1 // pred_check_branch
      %37 = sbr.rel (0) target = $region17
    $region16: #{tpu_custom_call.1} parent=1 // pred_region
      %39 = dma.done [#allocation6], 128
    $region17: #{tpu_custom_call.1} parent=1 // pred_fallthru
      _
    %v40 = vld [vmem:[#allocation2] sm:$0xff]
    %v41 = vld [vmem:[#allocation5] sm:$0xff]
    %v42 = vadd.f32 %v40, %v41
    %43 = vst [vmem:[#allocation7] sm:$0xff] %v42
    // Predicated region
    $region18: #{tpu_custom_call.1} parent=1 // pred_check
      _
    $region19: #{tpu_custom_call.1} parent=1 // pred_check_branch
      %45 = sbr.rel (0) target = $region21
    $region20: #{tpu_custom_call.1} parent=1 // pred_region
      %47 = vsyncadd [#allocation4], 0
      %s49 = sshll.u32 [#allocation7], 4
      %s50 = int_to_ptr.vmem [resolvable:$true] %s49
      %s51 = sshll.u32 %s2, 4
      %s52 = int_to_ptr.hbm [resolvable:$true] %s51
      %54 = dma.vmem_to_hbm [thread:$0]  %s50, 128, %s52, [#allocation4]
    $region21: #{tpu_custom_call.1} parent=1 // pred_fallthru
      _
    // Predicated region
    $region22: #{tpu_custom_call.1} parent=1 // pred_check
      _
    $region23: #{tpu_custom_call.1} parent=1 // pred_check_branch
      %56 = sbr.rel (0) target = $region25
    $region24: #{tpu_custom_call.1} parent=1 // pred_region
      %58 = dma.done [#allocation4], 128
    $region25: #{tpu_custom_call.1} parent=1 // pred_fallthru
      _
    %59 = vsyncpa [#allocation3], 1
    %60 = vsyncpa [#allocation6], 1
    %61 = vsyncpa [#allocation4], 1

</llo_original>
